<compile_context>
chip_gen: v6e
topology: v6e:2x2x1
jax: 0.10.0
libtpu: 0.0.40
codegen_flags: <defaults>
</compile_context>

<pallas_src>
import math
import functools

import jax
import jax.numpy as jnp
from jax import lax
from jax.experimental import pallas as pl
from jax.experimental.pallas import tpu as pltpu

# ---------------- configuration (small, consistent with the module) ----------------
B, C, H, W = 2, 4, 16, 16          # input image batch, NCHW
D_IN = C * H * W                   # flattened deep-net input
D_DEEP = 64                        # num_deep_features
D_GP = 32                          # num_gp_features (> 0  => JL projection active)
D_RF = 128                         # num_random_features
N_OUT = 10                         # num_outputs
N_OUT_PAD = 128                    # lane-dense padded logits head
D_CAT = N_OUT_PAD + D_RF           # fused beta-head + covariance RHS width (256)
RIDGE = 1.0                        # ridge_penalty
MEAN_FIELD_FACTOR = math.pi / 8.0  # > 0 => mean-field rescaling applied
LENGTHSCALE = math.sqrt(D_RF / 2)  # default lengthscale
LN_EPS = 1e-5                      # PyTorch LayerNorm default eps


# ----------------------------------- kernel ----------------------------------------
def _laplace_kernel(x_ref, wfer_ref, wrff_ref, brff_ref, wcat_ref, bb_ref,
                    out_ref, *, mean_field_factor):
    # x arrives f32; cast to bf16 in-kernel (VPU, hidden under the MXU) so the
    # wrapper never materializes a second HBM copy of x.
    x_lo = x_ref[...].astype(jnp.bfloat16)

    # fused feature extractor + JL projection: (TM, D_in) @ (D_in, D_gp)
    fr = jnp.dot(x_lo, wfer_ref[...], preferred_element_type=jnp.float32)

    # LayerNorm core (biased variance); affine gamma/beta already folded into
    # wrff / brff offline.
    mu = jnp.mean(fr, axis=-1, keepdims=True)
    var = jnp.mean((fr - mu) ** 2, axis=-1, keepdims=True)
    fr_n = ((fr - mu) * lax.rsqrt(var + LN_EPS)).astype(wrff_ref.dtype)

    # Random Fourier Features (1/lengthscale folded into beta_w and cov)
    z = jnp.dot(fr_n, wrff_ref[...], preferred_element_type=jnp.float32) + brff_ref[...]
    c_lo = jnp.cos(z).astype(wcat_ref.dtype)          # (TM, D_rf), bf16 MXU operand

    # Single 256-wide matmul for beta head + covariance: (TM, D_rf) @ (D_rf, 256)
    hc = jnp.dot(c_lo, wcat_ref[...], preferred_element_type=jnp.float32)
    logits = hc[:, :N_OUT_PAD] + bb_ref[...]           # (TM, 128)
    kc = hc[:, N_OUT_PAD:]                             # (TM, D_rf) = phi @ cov*ridge/L^2

    # diag(pred_cov) = diag( phi @ cov_scaled @ phi.T ); use bf16-rounded phi on
    # both sides of the quadratic form for precision consistency.
    diag_pred = jnp.sum(kc * c_lo.astype(jnp.float32), axis=-1, keepdims=True)

    # mean-field logits:  logits * rsqrt(1 + diag * mean_field_factor)
    scale = lax.rsqrt(1.0 + diag_pred * mean_field_factor)
    out_ref[...] = (logits * scale).astype(out_ref.dtype)


def _round_up(n, m):
    return ((n + m - 1) // m) * m


def _batch_tiling(b):
    """Pick the batch tile (sublane-aligned, large) and padded batch size."""
    tm = min(512, _round_up(max(b, 1), 16))
    n_steps = pl.cdiv(b, tm)
    if n_steps < 2:
        # Ensure >= 2 grid steps so the ("parallel",) axis shards across v7x's
        # two TensorCores; keep tm a multiple of 16 (bf16 packing granule).
        if tm >= 32:
            tm = _round_up(tm // 2, 16)
        n_steps = 2
    return tm, tm * n_steps


def laplace_forward(x_nchw, kp):
    b = x_nchw.shape[0]
    # NCHW -> (B, C*H*W); keep the arriving dtype (f32), cast happens in-kernel.
    x_flat = x_nchw.reshape(b, -1)
    d_in = x_flat.shape[1]

    tm, bp = _batch_tiling(b)
    if bp != b:
        x_flat = jnp.pad(x_flat, ((0, bp - b), (0, 0)))

    kernel = functools.partial(_laplace_kernel, mean_field_factor=MEAN_FIELD_FACTOR)
    out_pad = pl.pallas_call(
        kernel,
        out_shape=jax.ShapeDtypeStruct((bp, N_OUT_PAD), jnp.bfloat16),
        grid_spec=pltpu.PrefetchScalarGridSpec(
            num_scalar_prefetch=0,
            grid=(bp // tm,),
            in_specs=[
                pl.BlockSpec((tm, d_in), lambda i: (i, 0)),        # x tile (f32 stream)
                pl.BlockSpec((d_in, D_GP), lambda i: (0, 0)),      # fused w_fe @ r.T
                pl.BlockSpec((D_GP, D_RF), lambda i: (0, 0)),      # w_rff (gamma-folded)
                pl.BlockSpec((1, D_RF), lambda i: (0, 0)),         # b_rff (beta-folded)
                pl.BlockSpec((D_RF, D_CAT), lambda i: (0, 0)),     # [beta_w/L | cov*r/L^2]
                pl.BlockSpec((1, N_OUT_PAD), lambda i: (0, 0)),    # beta_b (padded)
            ],
            out_specs=pl.BlockSpec((tm, N_OUT_PAD), lambda i: (i, 0)),
        ),
        compiler_params=pltpu.CompilerParams(
            dimension_semantics=("parallel",)),   # shards batch across TCs on v7x
    )(
        x_flat, kp["w_fer"], kp["w_rff"], kp["b_rff"], kp["w_cat"], kp["beta_b"],
    )
    return out_pad[:b, :N_OUT].astype(jnp.float32)


# --------------------------- deterministic parameter init ---------------------------
def _random_ortho(key, n, m):
    q, _ = jnp.linalg.qr(jax.random.normal(key, (n, m), dtype=jnp.float32))
    return q


def init_params(key):
    """Reference (un-fused, f32) parameters, mirroring the PyTorch module at init."""
    ks = jax.random.split(key, 8)

    # synthetic feature extractor: linear (D_in -> D_deep)
    w_fe = jax.random.normal(ks[0], (D_IN, D_DEEP), jnp.float32) / math.sqrt(D_IN)

    # JL random matrix ~ N(0, 0.05), shape (D_gp, D_deep); used as its transpose
    random_matrix = 0.05 * jax.random.normal(ks[1], (D_GP, D_DEEP), jnp.float32)

    # LayerNorm(D_gp) default affine params
    ln_gamma = jnp.ones((1, D_GP), jnp.float32)
    ln_beta = jnp.zeros((1, D_GP), jnp.float32)

    # RFF weights: concat orthogonal (D_gp x D_gp) blocks since D_RF > D_gp
    n_blocks = D_RF // D_GP
    bkeys = jax.random.split(ks[2], n_blocks)
    w_blocks = [_random_ortho(bk, D_GP, D_GP) for bk in bkeys]
    w_rff = jnp.concatenate(w_blocks, axis=1)                        # (D_gp, D_RF)
    feature_norm = jax.random.normal(ks[3], w_rff.shape, jnp.float32) ** 2
    w_rff = w_rff * jnp.sqrt(feature_norm.sum(0))                    # scale columns
    b_rff = jax.random.uniform(ks[4], (1, D_RF), jnp.float32, 0.0, 2.0 * math.pi)

    # beta = nn.Linear(D_RF, N_OUT): uniform(-1/sqrt(D_RF), 1/sqrt(D_RF))
    bound = 1.0 / math.sqrt(D_RF)
    beta_w = jax.random.uniform(ks[5], (D_RF, N_OUT), jnp.float32, -bound, bound)
    beta_b = jax.random.uniform(ks[6], (1, N_OUT), jnp.float32, -bound, bound)

    # eval path: cov = inverse(precision_matrix); precision at init = I * ridge.
    # TODO(synk): matrix inverse has no clean Pallas equivalent; done in plain JAX.
    precision = jnp.eye(D_RF, dtype=jnp.float32) * RIDGE
    cov_ridge = jnp.linalg.inv(precision) * RIDGE                    # (D_RF, D_RF)

    return {
        "w_fe": w_fe,
        "r_t": random_matrix.T,
        "ln_gamma": ln_gamma,
        "ln_beta": ln_beta,
        "w_rff": w_rff,
        "b_rff": b_rff,
        "beta_w": beta_w,
        "beta_b": beta_b,
        "cov_ridge": cov_ridge,
    }


def fold_params(p):
    """Offline folds for the kernel: fuse matmuls, fold affine + 1/L, cast to bf16."""
    inv_l = 1.0 / LENGTHSCALE

    # fuse feature extractor with JL projection: (D_IN, D_GP)
    w_fer = (p["w_fe"] @ p["r_t"]).astype(jnp.bfloat16)

    # fold LayerNorm affine into the RFF layer
    w_rff_g = (p["w_rff"] * p["ln_gamma"].reshape(-1, 1)).astype(jnp.bfloat16)
    b_rff_f = (p["b_rff"] + p["ln_beta"] @ p["w_rff"]).astype(jnp.float32)

    # fold 1/L into beta head (padded to 128 lanes) and 1/L^2 into the covariance,
    # then concatenate into one lane-dense 256-wide RHS for a single MXU matmul.
    beta_w_pad = jnp.zeros((D_RF, N_OUT_PAD), jnp.float32)
    beta_w_pad = beta_w_pad.at[:, :N_OUT].set(p["beta_w"] * inv_l)
    cov_s = p["cov_ridge"] * (inv_l * inv_l)                         # (D_RF, D_RF)
    w_cat = jnp.concatenate([beta_w_pad, cov_s], axis=1).astype(jnp.bfloat16)
    beta_b_pad = jnp.zeros((1, N_OUT_PAD), jnp.float32).at[:, :N_OUT].set(p["beta_b"])

    return {
        "w_fer": w_fer,
        "w_rff": w_rff_g,
        "b_rff": b_rff_f,
        "w_cat": w_cat,
        "beta_b": beta_b_pad,
    }


# --------------------------------- pure-JAX reference --------------------------------
def laplace_forward_ref(x_nchw, p):
    x = x_nchw.reshape(x_nchw.shape[0], -1).astype(jnp.float32)
    f = x @ p["w_fe"]
    fr = f @ p["r_t"]
    mu = fr.mean(-1, keepdims=True)
    var = ((fr - mu) ** 2).mean(-1, keepdims=True)
    fr = (fr - mu) / jnp.sqrt(var + LN_EPS) * p["ln_gamma"] + p["ln_beta"]
    phi = jnp.cos(fr @ p["w_rff"] + p["b_rff"]) / LENGTHSCALE
    logits = phi @ p["beta_w"] + p["beta_b"]
    diag_pred = jnp.sum((phi @ p["cov_ridge"]) * phi, axis=-1, keepdims=True)
    scale = jnp.sqrt(1.0 + diag_pred * MEAN_FIELD_FACTOR)
    return logits / scale


# -------------------------------------- main -----------------------------------------
if __name__ == "__main__":
    key = jax.random.PRNGKey(0)
    k_x, k_p = jax.random.split(key)
    x = jax.random.normal(k_x, (B, C, H, W), jnp.float32)   # NCHW input
    params = init_params(k_p)
    kparams = fold_params(params)

    out = jax.block_until_ready(laplace_forward(x, kparams))
    ref = jax.block_until_ready(laplace_forward_ref(x, params))

    assert out.shape == (B, N_OUT)
    assert bool(jnp.all(jnp.isfinite(out)))
    assert bool(jnp.allclose(out, ref, rtol=2e-2, atol=2e-2))
    print("KERNEL_OK")
</pallas_src>

<mosaic_0001>
module attributes {stable_mosaic.version = 11 : i64} {
  func.func @_laplace_kernel(%arg0: i32, %arg1: memref<16x1024xf32, #tpu.memory_space<vmem>>, %arg2: memref<1024x32xbf16, #tpu.memory_space<vmem>>, %arg3: memref<32x128xbf16, #tpu.memory_space<vmem>>, %arg4: memref<1x128xf32, #tpu.memory_space<vmem>>, %arg5: memref<128x256xbf16, #tpu.memory_space<vmem>>, %arg6: memref<1x128xf32, #tpu.memory_space<vmem>>, %arg7: memref<16x128xbf16, #tpu.memory_space<vmem>>) attributes {dimension_semantics = [#tpu.dimension_semantics<parallel>], iteration_bounds = array<i64: 2>, scalar_prefetch = 0 : i64, scratch_operands = 0 : i64, tpu.core_type = #tpu.core_type<tc>, window_params = [{transform_indices = @transform_0, window_bounds = array<i64: 16, 1024>}, {pipeline_mode = #tpu.pipeline_mode<synchronous>, transform_indices = @transform_1, window_bounds = array<i64: 1024, 32>}, {pipeline_mode = #tpu.pipeline_mode<synchronous>, transform_indices = @transform_2, window_bounds = array<i64: 32, 128>}, {pipeline_mode = #tpu.pipeline_mode<synchronous>, transform_indices = @transform_3, window_bounds = array<i64: 1, 128>}, {pipeline_mode = #tpu.pipeline_mode<synchronous>, transform_indices = @transform_4, window_bounds = array<i64: 128, 256>}, {pipeline_mode = #tpu.pipeline_mode<synchronous>, transform_indices = @transform_5, window_bounds = array<i64: 1, 128>}, {transform_indices = @transform_6, window_bounds = array<i64: 16, 128>}]} {
    %c0 = arith.constant 0 : index
    %c0_0 = arith.constant 0 : index
    %0 = vector.load %arg1[%c0, %c0_0] : memref<16x1024xf32, #tpu.memory_space<vmem>>, vector<16x1024xf32>
    %1 = arith.truncf %0 : vector<16x1024xf32> to vector<16x1024xbf16>
    %c0_1 = arith.constant 0 : index
    %c0_2 = arith.constant 0 : index
    %2 = vector.load %arg2[%c0_1, %c0_2] : memref<1024x32xbf16, #tpu.memory_space<vmem>>, vector<1024x32xbf16>
    %cst = arith.constant dense<0.000000e+00> : vector<16x32xf32>
    %3 = tpu.matmul %1, %2, %cst {dimension_numbers = #tpu.dot_dimension_numbers<[1], [0], [0], [1], [0, 0, 1, 1], [], []>} : vector<16x1024xbf16>, vector<1024x32xbf16>, vector<16x32xf32> -> vector<16x32xf32>
    %cst_3 = arith.constant dense<0.000000e+00> : vector<16xf32>
    %4 = vector.multi_reduction <add>, %3, %cst_3 [1] : vector<16x32xf32> to vector<16xf32>
    %5 = vector.shape_cast %4 : vector<16xf32> to vector<16x1xf32>
    %cst_4 = arith.constant 3.200000e+01 : f32
    %6 = vector.broadcast %cst_4 : f32 to vector<16x1xf32>
    %7 = arith.divf %5, %6 : vector<16x1xf32>
    %8 = vector.broadcast %7 : vector<16x1xf32> to vector<16x32xf32>
    %9 = arith.subf %3, %8 : vector<16x32xf32>
    %10 = arith.mulf %9, %9 : vector<16x32xf32>
    %cst_5 = arith.constant dense<0.000000e+00> : vector<16xf32>
    %11 = vector.multi_reduction <add>, %10, %cst_5 [1] : vector<16x32xf32> to vector<16xf32>
    %12 = vector.shape_cast %11 : vector<16xf32> to vector<16x1xf32>
    %cst_6 = arith.constant 3.200000e+01 : f32
    %13 = vector.broadcast %cst_6 : f32 to vector<16x1xf32>
    %14 = arith.divf %12, %13 : vector<16x1xf32>
    %15 = vector.broadcast %7 : vector<16x1xf32> to vector<16x32xf32>
    %16 = arith.subf %3, %15 : vector<16x32xf32>
    %cst_7 = arith.constant 9.99999974E-6 : f32
    %17 = vector.broadcast %cst_7 : f32 to vector<16x1xf32>
    %18 = arith.addf %14, %17 : vector<16x1xf32>
    %19 = math.rsqrt %18 : vector<16x1xf32>
    %20 = vector.broadcast %19 : vector<16x1xf32> to vector<16x32xf32>
    %21 = arith.mulf %16, %20 : vector<16x32xf32>
    %22 = arith.truncf %21 : vector<16x32xf32> to vector<16x32xbf16>
    %c0_8 = arith.constant 0 : index
    %c0_9 = arith.constant 0 : index
    %23 = vector.load %arg3[%c0_8, %c0_9] : memref<32x128xbf16, #tpu.memory_space<vmem>>, vector<32x128xbf16>
    %cst_10 = arith.constant dense<0.000000e+00> : vector<16x128xf32>
    %24 = tpu.matmul %22, %23, %cst_10 {dimension_numbers = #tpu.dot_dimension_numbers<[1], [0], [0], [1], [0, 0, 1, 1], [], []>} : vector<16x32xbf16>, vector<32x128xbf16>, vector<16x128xf32> -> vector<16x128xf32>
    %c0_11 = arith.constant 0 : index
    %c0_12 = arith.constant 0 : index
    %25 = vector.load %arg4[%c0_11, %c0_12] : memref<1x128xf32, #tpu.memory_space<vmem>>, vector<1x128xf32>
    %26 = vector.broadcast %25 : vector<1x128xf32> to vector<16x128xf32>
    %27 = arith.addf %24, %26 : vector<16x128xf32>
    %28 = math.cos %27 : vector<16x128xf32>
    %29 = arith.truncf %28 : vector<16x128xf32> to vector<16x128xbf16>
    %c0_13 = arith.constant 0 : index
    %c0_14 = arith.constant 0 : index
    %30 = vector.load %arg5[%c0_13, %c0_14] : memref<128x256xbf16, #tpu.memory_space<vmem>>, vector<128x256xbf16>
    %cst_15 = arith.constant dense<0.000000e+00> : vector<16x256xf32>
    %31 = tpu.matmul %29, %30, %cst_15 {dimension_numbers = #tpu.dot_dimension_numbers<[1], [0], [0], [1], [0, 0, 1, 1], [], []>} : vector<16x128xbf16>, vector<128x256xbf16>, vector<16x256xf32> -> vector<16x256xf32>
    %32 = vector.extract_strided_slice %31 {offsets = [0, 0], sizes = [16, 128], strides = [1, 1]} : vector<16x256xf32> to vector<16x128xf32>
    %c0_16 = arith.constant 0 : index
    %c0_17 = arith.constant 0 : index
    %33 = vector.load %arg6[%c0_16, %c0_17] : memref<1x128xf32, #tpu.memory_space<vmem>>, vector<1x128xf32>
    %34 = vector.broadcast %33 : vector<1x128xf32> to vector<16x128xf32>
    %35 = arith.addf %32, %34 : vector<16x128xf32>
    %36 = vector.extract_strided_slice %31 {offsets = [0, 128], sizes = [16, 128], strides = [1, 1]} : vector<16x256xf32> to vector<16x128xf32>
    %37 = arith.extf %29 : vector<16x128xbf16> to vector<16x128xf32>
    %38 = arith.mulf %36, %37 : vector<16x128xf32>
    %cst_18 = arith.constant dense<0.000000e+00> : vector<16xf32>
    %39 = vector.multi_reduction <add>, %38, %cst_18 [1] : vector<16x128xf32> to vector<16xf32>
    %40 = vector.shape_cast %39 : vector<16xf32> to vector<16x1xf32>
    %cst_19 = arith.constant 0.392699093 : f32
    %41 = vector.broadcast %cst_19 : f32 to vector<16x1xf32>
    %42 = arith.mulf %40, %41 : vector<16x1xf32>
    %cst_20 = arith.constant 1.000000e+00 : f32
    %43 = vector.broadcast %cst_20 : f32 to vector<16x1xf32>
    %44 = arith.addf %43, %42 : vector<16x1xf32>
    %45 = math.rsqrt %44 : vector<16x1xf32>
    %46 = vector.broadcast %45 : vector<16x1xf32> to vector<16x128xf32>
    %47 = arith.mulf %35, %46 : vector<16x128xf32>
    %48 = arith.truncf %47 : vector<16x128xf32> to vector<16x128xbf16>
    %c0_21 = arith.constant 0 : index
    %c0_22 = arith.constant 0 : index
    %49 = vector.load %arg7[%c0_21, %c0_22] : memref<16x128xbf16, #tpu.memory_space<vmem>>, vector<16x128xbf16>
    tpu.vector_store %arg7[%c0_21, %c0_22], %48 {strides = array<i32>} : memref<16x128xbf16, #tpu.memory_space<vmem>>, vector<16x128xbf16>,
    return
  }
  func.func @transform_0(%arg0: i32) -> (i32, i32) {
    %c0_i32 = arith.constant 0 : i32
    %c0_i32_0 = arith.constant 0 : i32
    return %arg0, %c0_i32 : i32, i32
  }
  func.func @transform_1(%arg0: i32) -> (i32, i32) {
    %c0_i32 = arith.constant 0 : i32
    %c0_i32_0 = arith.constant 0 : i32
    %c0_i32_1 = arith.constant 0 : i32
    return %c0_i32, %c0_i32_0 : i32, i32
  }
  func.func @transform_2(%arg0: i32) -> (i32, i32) {
    %c0_i32 = arith.constant 0 : i32
    %c0_i32_0 = arith.constant 0 : i32
    %c0_i32_1 = arith.constant 0 : i32
    return %c0_i32, %c0_i32_0 : i32, i32
  }
  func.func @transform_3(%arg0: i32) -> (i32, i32) {
    %c0_i32 = arith.constant 0 : i32
    %c0_i32_0 = arith.constant 0 : i32
    %c0_i32_1 = arith.constant 0 : i32
    return %c0_i32, %c0_i32_0 : i32, i32
  }
  func.func @transform_4(%arg0: i32) -> (i32, i32) {
    %c0_i32 = arith.constant 0 : i32
    %c0_i32_0 = arith.constant 0 : i32
    %c0_i32_1 = arith.constant 0 : i32
    return %c0_i32, %c0_i32_0 : i32, i32
  }
  func.func @transform_5(%arg0: i32) -> (i32, i32) {
    %c0_i32 = arith.constant 0 : i32
    %c0_i32_0 = arith.constant 0 : i32
    %c0_i32_1 = arith.constant 0 : i32
    return %c0_i32, %c0_i32_0 : i32, i32
  }
  func.func @transform_6(%arg0: i32) -> (i32, i32) {
    %c0_i32 = arith.constant 0 : i32
    %c0_i32_0 = arith.constant 0 : i32
    return %arg0, %c0_i32 : i32, i32
  }
}

</mosaic_0001>

<llo_original>
// kernel: tpu_custom_call.1
$region0: #{tpu_custom_call.1}
  #allocation0 [shape = 'u32[]', space=smem, size = 0x4, offset = 0x4, fixed_abs, tag = 'smem constant byte address 0x4 - core index']
  #allocation1 [shape = 'u32[144,128]{1,0:T(1,128)}', space=vmem, size = 0x12000, scoped, tag = 'internal scratch']
  %s0 = inlined_call_operand.vmem [shape: f32[32,1024], index: 0, kind: input, shape index: {}]
  %s1 = inlined_call_operand.vmem [shape: bf16[1024,32], index: 1, kind: input, shape index: {}]
  %s2 = inlined_call_operand.vmem [shape: bf16[32,128], index: 2, kind: input, shape index: {}]
  %s3 = inlined_call_operand.vmem [shape: f32[1,128], index: 3, kind: input, shape index: {}]
  %s4 = inlined_call_operand.vmem [shape: bf16[128,256], index: 4, kind: input, shape index: {}]
  %s5 = inlined_call_operand.vmem [shape: f32[1,128], index: 5, kind: input, shape index: {}]
  %s6 = inlined_call_operand.hbm [shape: bf16[32,128], index: 6, kind: output, shape index: {}]
  %s7 = sld [smem:[#allocation0]]
  $region57: #{tpu_custom_call.1} parent=0
    _
  %s9 = ssub.s32 1, %s7
  %s10 = scalar_select 0, %s9, %s7
  $region1: #{tpu_custom_call.1} parent=0
    #allocation2 [shape = 'u8[8192]{0}', space=vmem, size = 0x2000, scoped, tag = 'output window, operand 0']
    #allocation3 [shape = 's32[2]{0}', space=sflag, size = 0x8, scoped, tag = 'scoped memory for tpu_custom_call.1']
    %11 = vsyncpa [#allocation3], 0
    %s12 = scalar_lea.sflag [#allocation3], 1
    %13 = vsyncpa %s12, 0
    loop: start=0, step=1, limit=4
    $region2: #{tpu_custom_call.1} parent=1 // loop_pre_header
      _
    $region3: #{tpu_custom_call.1} parent=1 // loop_header
      %s15 = sphi 0, %s19
      %p16 = scmp.ge.s32.totalorder %s15, 4
      %s25 = sphi 0, %s27
      %s28 = sphi 0, %s25
      %s29 = sphi 0, %s28
      %s45 = sphi 0, %s29
      %s49 = sphi 0, %s49
      %s51 = sphi 0, %s49
      %s52 = sphi 0, %s51
      %s66 = sphi 0, %s52
      %s70 = sphi 0, %s70
      %s72 = sphi 0, %s70
      %s73 = sphi 0, %s72
      %s87 = sphi 0, %s73
      %s91 = sphi 0, %s91
      %s93 = sphi 0, %s91
      %s94 = sphi 0, %s93
      %s108 = sphi 0, %s94
      %s112 = sphi 0, %s112
      %s114 = sphi 0, %s112
      %s115 = sphi 0, %s114
      %s129 = sphi 0, %s115
      %s133 = sphi 0, %s133
      %s135 = sphi 0, %s133
      %s136 = sphi 0, %s135
      %s150 = sphi 0, %s136
      %s156 = sphi 0, %s158
      %s159 = sphi 0, %s156
      %s160 = sphi 0, %s159
      %s176 = sphi 0, %s160
    $region4: #{tpu_custom_call.1} parent=1 // loop_header_branch
      %18 = sbr.rel (%p16) target = $region8
    $region5: #{tpu_custom_call.1} parent=1 // loop_body
      %s20 = ssub.s32 %s15, 1
      %s21 = ssub.s32 %s15, 2
      %s22 = sadd.s32 %s15, 1
      %s23 = ssub.s32 %s15, %s22
      %p24 = scmp.eq.s32.totalorder %s23, 0
      %s26 = sadd.s32 %s25, 1
      %s27 = scalar_select %p24, %s25, %s26
      %p30 = pneg %p24
      %p31 = scmp.eq.s32.totalorder %s15, 1
      %p32 = por %p30, %p31
      %p33 = scmp.ne.s32.totalorder %s25, %s28
      %p34 = scmp.eq.s32.totalorder %s15, 0
      %p35 = por %p33, %p34
      %p36 = scmp.ne.s32.totalorder %s25, %s28
      %p37 = scmp.eq.s32.totalorder %s20, 1
      %p38 = por %p36, %p37
      %p39 = scmp.ne.s32.totalorder %s28, %s29
      %p40 = scmp.eq.s32.totalorder %s20, 0
      %p41 = por %p39, %p40
      %p42 = scmp.ne.s32.totalorder %s28, %s29
      %p43 = scmp.eq.s32.totalorder %s21, 1
      %p44 = por %p42, %p43
      %p46 = scmp.ne.s32.totalorder %s29, %s45
      %p47 = scmp.eq.s32.totalorder %s21, 0
      %p48 = por %p46, %p47
      %s50 = sadd.s32 %s49, 1
      %p53 = scmp.eq.s32.totalorder %s15, 1
      %p54 = scmp.ne.s32.totalorder %s49, %s51
      %p55 = scmp.eq.s32.totalorder %s15, 0
      %p56 = por %p54, %p55
      %p57 = scmp.ne.s32.totalorder %s49, %s51
      %p58 = scmp.eq.s32.totalorder %s20, 1
      %p59 = por %p57, %p58
      %p60 = scmp.ne.s32.totalorder %s51, %s52
      %p61 = scmp.eq.s32.totalorder %s20, 0
      %p62 = por %p60, %p61
      %p63 = scmp.ne.s32.totalorder %s51, %s52
      %p64 = scmp.eq.s32.totalorder %s21, 1
      %p65 = por %p63, %p64
      %p67 = scmp.ne.s32.totalorder %s52, %s66
      %p68 = scmp.eq.s32.totalorder %s21, 0
      %p69 = por %p67, %p68
      %s71 = sadd.s32 %s70, 1
      %p74 = scmp.eq.s32.totalorder %s15, 1
      %p75 = scmp.ne.s32.totalorder %s70, %s72
      %p76 = scmp.eq.s32.totalorder %s15, 0
      %p77 = por %p75, %p76
      %p78 = scmp.ne.s32.totalorder %s70, %s72
      %p79 = scmp.eq.s32.totalorder %s20, 1
      %p80 = por %p78, %p79
      %p81 = scmp.ne.s32.totalorder %s72, %s73
      %p82 = scmp.eq.s32.totalorder %s20, 0
      %p83 = por %p81, %p82
      %p84 = scmp.ne.s32.totalorder %s72, %s73
      %p85 = scmp.eq.s32.totalorder %s21, 1
      %p86 = por %p84, %p85
      %p88 = scmp.ne.s32.totalorder %s73, %s87
      %p89 = scmp.eq.s32.totalorder %s21, 0
      %p90 = por %p88, %p89
      %s92 = sadd.s32 %s91, 1
      %p95 = scmp.eq.s32.totalorder %s15, 1
      %p96 = scmp.ne.s32.totalorder %s91, %s93
      %p97 = scmp.eq.s32.totalorder %s15, 0
      %p98 = por %p96, %p97
      %p99 = scmp.ne.s32.totalorder %s91, %s93
      %p100 = scmp.eq.s32.totalorder %s20, 1
      %p101 = por %p99, %p100
      %p102 = scmp.ne.s32.totalorder %s93, %s94
      %p103 = scmp.eq.s32.totalorder %s20, 0
      %p104 = por %p102, %p103
      %p105 = scmp.ne.s32.totalorder %s93, %s94
      %p106 = scmp.eq.s32.totalorder %s21, 1
      %p107 = por %p105, %p106
      %p109 = scmp.ne.s32.totalorder %s94, %s108
      %p110 = scmp.eq.s32.totalorder %s21, 0
      %p111 = por %p109, %p110
      %s113 = sadd.s32 %s112, 1
      %p116 = scmp.eq.s32.totalorder %s15, 1
      %p117 = scmp.ne.s32.totalorder %s112, %s114
      %p118 = scmp.eq.s32.totalorder %s15, 0
      %p119 = por %p117, %p118
      %p120 = scmp.ne.s32.totalorder %s112, %s114
      %p121 = scmp.eq.s32.totalorder %s20, 1
      %p122 = por %p120, %p121
      %p123 = scmp.ne.s32.totalorder %s114, %s115
      %p124 = scmp.eq.s32.totalorder %s20, 0
      %p125 = por %p123, %p124
      %p126 = scmp.ne.s32.totalorder %s114, %s115
      %p127 = scmp.eq.s32.totalorder %s21, 1
      %p128 = por %p126, %p127
      %p130 = scmp.ne.s32.totalorder %s115, %s129
      %p131 = scmp.eq.s32.totalorder %s21, 0
      %p132 = por %p130, %p131
      %s134 = sadd.s32 %s133, 1
      %p137 = scmp.eq.s32.totalorder %s15, 1
      %p138 = scmp.ne.s32.totalorder %s133, %s135
      %p139 = scmp.eq.s32.totalorder %s15, 0
      %p140 = por %p138, %p139
      %p141 = scmp.ne.s32.totalorder %s133, %s135
      %p142 = scmp.eq.s32.totalorder %s20, 1
      %p143 = por %p141, %p142
      %p144 = scmp.ne.s32.totalorder %s135, %s136
      %p145 = scmp.eq.s32.totalorder %s20, 0
      %p146 = por %p144, %p145
      %p147 = scmp.ne.s32.totalorder %s135, %s136
      %p148 = scmp.eq.s32.totalorder %s21, 1
      %p149 = por %p147, %p148
      %p151 = scmp.ne.s32.totalorder %s136, %s150
      %p152 = scmp.eq.s32.totalorder %s21, 0
      %p153 = por %p151, %p152
      %s154 = ssub.s32 %s15, %s22
      %p155 = scmp.eq.s32.totalorder %s154, 0
      %s157 = sadd.s32 %s156, 1
      %s158 = scalar_select %p155, %s156, %s157
      %p161 = pneg %p155
      %p162 = scmp.eq.s32.totalorder %s15, 1
      %p163 = por %p161, %p162
      %p164 = scmp.ne.s32.totalorder %s156, %s159
      %p165 = scmp.eq.s32.totalorder %s15, 0
      %p166 = por %p164, %p165
      %p167 = scmp.ne.s32.totalorder %s156, %s159
      %p168 = scmp.eq.s32.totalorder %s20, 1
      %p169 = por %p167, %p168
      %p170 = scmp.ne.s32.totalorder %s159, %s160
      %p171 = scmp.eq.s32.totalorder %s20, 0
      %p172 = por %p170, %p171
      %p173 = scmp.ne.s32.totalorder %s159, %s160
      %p174 = scmp.eq.s32.totalorder %s21, 1
      %p175 = por %p173, %p174
      %p177 = scmp.ne.s32.totalorder %s160, %s176
      %p178 = scmp.eq.s32.totalorder %s21, 0
      %p179 = por %p177, %p178
      %p180 = scmp.le.s32.totalorder 1, %s15
      %p181 = scmp.lt.s32.totalorder %s15, 3
      %p182 = pnand %p180, %p181
      %p183 = pneg %p182
      // Predicated region
      $region9: #{tpu_custom_call.1} parent=5 // pred_check
        _
      $region10: #{tpu_custom_call.1} parent=5 // pred_check_branch
        %185 = sbr.rel (%p182) target = $region12
      $region11: #{tpu_custom_call.1} parent=5 // pred_region
        %s186 = ssub.s32 %s15, 1
        // Predicated region
        $region13: #{tpu_custom_call.1} parent=11 // pred_check
          %p187 = pneg %p62
        $region14: #{tpu_custom_call.1} parent=11 // pred_check_branch
          %189 = sbr.rel (%p187) target = $region16
        $region15: #{tpu_custom_call.1} parent=11 // pred_region
          _
        $region16: #{tpu_custom_call.1} parent=11 // pred_fallthru
          _
        // Predicated region
        $region17: #{tpu_custom_call.1} parent=11 // pred_check
          %p190 = pneg %p83
        $region18: #{tpu_custom_call.1} parent=11 // pred_check_branch
          %192 = sbr.rel (%p190) target = $region20
        $region19: #{tpu_custom_call.1} parent=11 // pred_region
          _
        $region20: #{tpu_custom_call.1} parent=11 // pred_fallthru
          _
        // Predicated region
        $region21: #{tpu_custom_call.1} parent=11 // pred_check
          %p193 = pneg %p104
        $region22: #{tpu_custom_call.1} parent=11 // pred_check_branch
          %195 = sbr.rel (%p193) target = $region24
        $region23: #{tpu_custom_call.1} parent=11 // pred_region
          _
        $region24: #{tpu_custom_call.1} parent=11 // pred_fallthru
          _
        // Predicated region
        $region25: #{tpu_custom_call.1} parent=11 // pred_check
          %p196 = pneg %p125
        $region26: #{tpu_custom_call.1} parent=11 // pred_check_branch
          %198 = sbr.rel (%p196) target = $region28
        $region27: #{tpu_custom_call.1} parent=11 // pred_region
          _
        $region28: #{tpu_custom_call.1} parent=11 // pred_fallthru
          _
        // Predicated region
        $region29: #{tpu_custom_call.1} parent=11 // pred_check
          %p199 = pneg %p146
        $region30: #{tpu_custom_call.1} parent=11 // pred_check_branch
          %201 = sbr.rel (%p199) target = $region32
        $region31: #{tpu_custom_call.1} parent=11 // pred_region
          _
        $region32: #{tpu_custom_call.1} parent=11 // pred_fallthru
          _
      $region12: #{tpu_custom_call.1} parent=5 // pred_fallthru
        _
      %p202 = scmp.lt.s32.totalorder %s15, 2
      // Predicated region
      $region33: #{tpu_custom_call.1} parent=5 // pred_check
        %p203 = pneg %p202
      $region34: #{tpu_custom_call.1} parent=5 // pred_check_branch
        %205 = sbr.rel (%p203) target = $region36
      $region35: #{tpu_custom_call.1} parent=5 // pred_region
        // Predicated region
        $region37: #{tpu_custom_call.1} parent=35 // pred_check
          %p206 = pneg %p35
        $region38: #{tpu_custom_call.1} parent=35 // pred_check_branch
          %208 = sbr.rel (%p206) target = $region40
        $region39: #{tpu_custom_call.1} parent=35 // pred_region
          %s209 = smul.u32 2, %s15
          %p210 = scmp.lt.s32.totalorder %s209, 3
          %s211 = scalar_select %p210, %s209, 3
          %s212 = smul.addr %s211, 8
          %s213 = smul.addr %s212, 8
          %s214 = scalar_lea.vmem %s0, %s213
          %s215 = smul.u32 2, %s15
        $region40: #{tpu_custom_call.1} parent=35 // pred_fallthru
          _
      $region36: #{tpu_custom_call.1} parent=5 // pred_fallthru
        _
      %p216 = scmp.le.s32.totalorder 1, %s15
      %p217 = scmp.lt.s32.totalorder %s15, 3
      %p218 = pnand %p216, %p217
      %p219 = pneg %p218
      // Predicated region
      $region41: #{tpu_custom_call.1} parent=5 // pred_check
        _
      $region42: #{tpu_custom_call.1} parent=5 // pred_check_branch
        %221 = sbr.rel (%p218) target = $region44
      $region43: #{tpu_custom_call.1} parent=5 // pred_region
        %s222 = ssub.s32 %s15, 1
        %s223 = smul.u32 2, %s20
        %p224 = scmp.lt.s32.totalorder %s223, 3
        %s225 = scalar_select %p224, %s223, 3
        %s226 = smul.addr %s225, 8
        %s227 = smul.addr %s226, 8
        %s228 = scalar_lea.vmem %s0, %s227
        %p229 = pneg %p41
        %p230 = pneg %p38
        %p231 = pneg %p62
        %p232 = pneg %p59
        %p233 = pneg %p83
        %p234 = pneg %p80
        %p235 = pneg %p104
        %p236 = pneg %p101
        %p237 = pneg %p125
        %p238 = pneg %p122
        %p239 = pneg %p146
        %p240 = pneg %p143
        %p241 = pneg %p172
        %p242 = pneg %p169
        %s243 = sand.u32 %s159, 1
        %s244 = scalar_lea.sflag [#allocation3], %s243
        %s245 = sand.u32 %s159, 1
        %s246 = smul.addr %s245, 8
        %s247 = scalar_lea.vmem [#allocation2], %s246
        %s248 = smul.u32 2, %s20
        %p249 = scmp.lt.s32.totalorder %s248, 3
        %s250 = scalar_select %p249, %s248, 3
        %s251 = smul.addr %s250, 8
        %s252 = smul.addr %s251, 8
        %s253 = scalar_lea.vmem %s0, %s252
        %s254 = smul.u32 2, %s20
        %s255 = smul.u32 2, %s20
        %v257 = vld [vmem:[%s253] sm:$0xff]
        %v258 = vld [vmem:[%s253 + $0x8] sm:$0xff]
        %v259 = vld [vmem:[%s253 + $0x10] sm:$0xff]
        %v260 = vld [vmem:[%s253 + $0x18] sm:$0xff]
        %v261 = vld [vmem:[%s253 + $0x20] sm:$0xff]
        %v262 = vld [vmem:[%s253 + $0x28] sm:$0xff]
        %v263 = vld [vmem:[%s253 + $0x30] sm:$0xff]
        %v264 = vld [vmem:[%s253 + $0x38] sm:$0xff]
        %v265 = vld [vmem:[%s253 + $0x40] sm:$0xff]
        %v266 = vld [vmem:[%s253 + $0x48] sm:$0xff]
        %v267 = vld [vmem:[%s253 + $0x50] sm:$0xff]
        %v268 = vld [vmem:[%s253 + $0x58] sm:$0xff]
        %v269 = vld [vmem:[%s253 + $0x60] sm:$0xff]
        %v270 = vld [vmem:[%s253 + $0x68] sm:$0xff]
        %v271 = vld [vmem:[%s253 + $0x70] sm:$0xff]
        %v272 = vld [vmem:[%s253 + $0x78] sm:$0xff]
        %v273 = vpack.c.bf16 %v265, %v257
        %v274 = vpack.c.bf16 %v266, %v258
        %v275 = vpack.c.bf16 %v267, %v259
        %v276 = vpack.c.bf16 %v268, %v260
        %v277 = vpack.c.bf16 %v269, %v261
        %v278 = vpack.c.bf16 %v270, %v262
        %v279 = vpack.c.bf16 %v271, %v263
        %v280 = vpack.c.bf16 %v272, %v264
        %v281 = vld [vmem:[%s1] sm:$0xf]
        %v282 = vld [vmem:[%s1 + $0x4] sm:$0xf]
        %v283 = vld [vmem:[%s1 + $0x8] sm:$0xf]
        %v284 = vld [vmem:[%s1 + $0xc] sm:$0xf]
        %v285 = vld [vmem:[%s1 + $0x10] sm:$0xf]
        %v286 = vld [vmem:[%s1 + $0x14] sm:$0xf]
        %v287 = vld [vmem:[%s1 + $0x18] sm:$0xf]
        %v288 = vld [vmem:[%s1 + $0x1c] sm:$0xf]
        %v289 = vld [vmem:[%s1 + $0x20] sm:$0xf]
        %v290 = vld [vmem:[%s1 + $0x24] sm:$0xf]
        %v291 = vld [vmem:[%s1 + $0x28] sm:$0xf]
        %v292 = vld [vmem:[%s1 + $0x2c] sm:$0xf]
        %v293 = vld [vmem:[%s1 + $0x30] sm:$0xf]
        %v294 = vld [vmem:[%s1 + $0x34] sm:$0xf]
        %v295 = vld [vmem:[%s1 + $0x38] sm:$0xf]
        %v296 = vld [vmem:[%s1 + $0x3c] sm:$0xf]
        %v297 = vld [vmem:[%s1 + $0x40] sm:$0xf]
        %v298 = vld [vmem:[%s1 + $0x44] sm:$0xf]
        %v299 = vld [vmem:[%s1 + $0x48] sm:$0xf]
        %v300 = vld [vmem:[%s1 + $0x4c] sm:$0xf]
        %v301 = vld [vmem:[%s1 + $0x50] sm:$0xf]
        %v302 = vld [vmem:[%s1 + $0x54] sm:$0xf]
        %v303 = vld [vmem:[%s1 + $0x58] sm:$0xf]
        %v304 = vld [vmem:[%s1 + $0x5c] sm:$0xf]
        %v305 = vld [vmem:[%s1 + $0x60] sm:$0xf]
        %v306 = vld [vmem:[%s1 + $0x64] sm:$0xf]
        %v307 = vld [vmem:[%s1 + $0x68] sm:$0xf]
        %v308 = vld [vmem:[%s1 + $0x6c] sm:$0xf]
        %v309 = vld [vmem:[%s1 + $0x70] sm:$0xf]
        %v310 = vld [vmem:[%s1 + $0x74] sm:$0xf]
        %v311 = vld [vmem:[%s1 + $0x78] sm:$0xf]
        %v312 = vld [vmem:[%s1 + $0x7c] sm:$0xf]
        %v313 = vld [vmem:[%s1 + $0x80] sm:$0xf]
        %v314 = vld [vmem:[%s1 + $0x84] sm:$0xf]
        %v315 = vld [vmem:[%s1 + $0x88] sm:$0xf]
        %v316 = vld [vmem:[%s1 + $0x8c] sm:$0xf]
        %v317 = vld [vmem:[%s1 + $0x90] sm:$0xf]
        %v318 = vld [vmem:[%s1 + $0x94] sm:$0xf]
        %v319 = vld [vmem:[%s1 + $0x98] sm:$0xf]
        %v320 = vld [vmem:[%s1 + $0x9c] sm:$0xf]
        %v321 = vld [vmem:[%s1 + $0xa0] sm:$0xf]
        %v322 = vld [vmem:[%s1 + $0xa4] sm:$0xf]
        %v323 = vld [vmem:[%s1 + $0xa8] sm:$0xf]
        %v324 = vld [vmem:[%s1 + $0xac] sm:$0xf]
        %v325 = vld [vmem:[%s1 + $0xb0] sm:$0xf]
        %v326 = vld [vmem:[%s1 + $0xb4] sm:$0xf]
        %v327 = vld [vmem:[%s1 + $0xb8] sm:$0xf]
        %v328 = vld [vmem:[%s1 + $0xbc] sm:$0xf]
        %v329 = vld [vmem:[%s1 + $0xc0] sm:$0xf]
        %v330 = vld [vmem:[%s1 + $0xc4] sm:$0xf]
        %v331 = vld [vmem:[%s1 + $0xc8] sm:$0xf]
        %v332 = vld [vmem:[%s1 + $0xcc] sm:$0xf]
        %v333 = vld [vmem:[%s1 + $0xd0] sm:$0xf]
        %v334 = vld [vmem:[%s1 + $0xd4] sm:$0xf]
        %v335 = vld [vmem:[%s1 + $0xd8] sm:$0xf]
        %v336 = vld [vmem:[%s1 + $0xdc] sm:$0xf]
        %v337 = vld [vmem:[%s1 + $0xe0] sm:$0xf]
        %v338 = vld [vmem:[%s1 + $0xe4] sm:$0xf]
        %v339 = vld [vmem:[%s1 + $0xe8] sm:$0xf]
        %v340 = vld [vmem:[%s1 + $0xec] sm:$0xf]
        %v341 = vld [vmem:[%s1 + $0xf0] sm:$0xf]
        %v342 = vld [vmem:[%s1 + $0xf4] sm:$0xf]
        %v343 = vld [vmem:[%s1 + $0xf8] sm:$0xf]
        %v344 = vld [vmem:[%s1 + $0xfc] sm:$0xf]
        %v345 = vld [vmem:[%s1 + $0x100] sm:$0xf]
        %v346 = vld [vmem:[%s1 + $0x104] sm:$0xf]
        %v347 = vld [vmem:[%s1 + $0x108] sm:$0xf]
        %v348 = vld [vmem:[%s1 + $0x10c] sm:$0xf]
        %v349 = vld [vmem:[%s1 + $0x110] sm:$0xf]
        %v350 = vld [vmem:[%s1 + $0x114] sm:$0xf]
        %v351 = vld [vmem:[%s1 + $0x118] sm:$0xf]
        %v352 = vld [vmem:[%s1 + $0x11c] sm:$0xf]
        %v353 = vld [vmem:[%s1 + $0x120] sm:$0xf]
        %v354 = vld [vmem:[%s1 + $0x124] sm:$0xf]
        %v355 = vld [vmem:[%s1 + $0x128] sm:$0xf]
        %v356 = vld [vmem:[%s1 + $0x12c] sm:$0xf]
        %v357 = vld [vmem:[%s1 + $0x130] sm:$0xf]
        %v358 = vld [vmem:[%s1 + $0x134] sm:$0xf]
        %v359 = vld [vmem:[%s1 + $0x138] sm:$0xf]
        %v360 = vld [vmem:[%s1 + $0x13c] sm:$0xf]
        %v361 = vld [vmem:[%s1 + $0x140] sm:$0xf]
        %v362 = vld [vmem:[%s1 + $0x144] sm:$0xf]
        %v363 = vld [vmem:[%s1 + $0x148] sm:$0xf]
        %v364 = vld [vmem:[%s1 + $0x14c] sm:$0xf]
        %v365 = vld [vmem:[%s1 + $0x150] sm:$0xf]
        %v366 = vld [vmem:[%s1 + $0x154] sm:$0xf]
        %v367 = vld [vmem:[%s1 + $0x158] sm:$0xf]
        %v368 = vld [vmem:[%s1 + $0x15c] sm:$0xf]
        %v369 = vld [vmem:[%s1 + $0x160] sm:$0xf]
        %v370 = vld [vmem:[%s1 + $0x164] sm:$0xf]
        %v371 = vld [vmem:[%s1 + $0x168] sm:$0xf]
        %v372 = vld [vmem:[%s1 + $0x16c] sm:$0xf]
        %v373 = vld [vmem:[%s1 + $0x170] sm:$0xf]
        %v374 = vld [vmem:[%s1 + $0x174] sm:$0xf]
        %v375 = vld [vmem:[%s1 + $0x178] sm:$0xf]
        %v376 = vld [vmem:[%s1 + $0x17c] sm:$0xf]
        %v377 = vld [vmem:[%s1 + $0x180] sm:$0xf]
        %v378 = vld [vmem:[%s1 + $0x184] sm:$0xf]
        %v379 = vld [vmem:[%s1 + $0x188] sm:$0xf]
        %v380 = vld [vmem:[%s1 + $0x18c] sm:$0xf]
        %v381 = vld [vmem:[%s1 + $0x190] sm:$0xf]
        %v382 = vld [vmem:[%s1 + $0x194] sm:$0xf]
        %v383 = vld [vmem:[%s1 + $0x198] sm:$0xf]
        %v384 = vld [vmem:[%s1 + $0x19c] sm:$0xf]
        %v385 = vld [vmem:[%s1 + $0x1a0] sm:$0xf]
        %v386 = vld [vmem:[%s1 + $0x1a4] sm:$0xf]
        %v387 = vld [vmem:[%s1 + $0x1a8] sm:$0xf]
        %v388 = vld [vmem:[%s1 + $0x1ac] sm:$0xf]
        %v389 = vld [vmem:[%s1 + $0x1b0] sm:$0xf]
        %v390 = vld [vmem:[%s1 + $0x1b4] sm:$0xf]
        %v391 = vld [vmem:[%s1 + $0x1b8] sm:$0xf]
        %v392 = vld [vmem:[%s1 + $0x1bc] sm:$0xf]
        %v393 = vld [vmem:[%s1 + $0x1c0] sm:$0xf]
        %v394 = vld [vmem:[%s1 + $0x1c4] sm:$0xf]
        %v395 = vld [vmem:[%s1 + $0x1c8] sm:$0xf]
        %v396 = vld [vmem:[%s1 + $0x1cc] sm:$0xf]
        %v397 = vld [vmem:[%s1 + $0x1d0] sm:$0xf]
        %v398 = vld [vmem:[%s1 + $0x1d4] sm:$0xf]
        %v399 = vld [vmem:[%s1 + $0x1d8] sm:$0xf]
        %v400 = vld [vmem:[%s1 + $0x1dc] sm:$0xf]
        %v401 = vld [vmem:[%s1 + $0x1e0] sm:$0xf]
        %v402 = vld [vmem:[%s1 + $0x1e4] sm:$0xf]
        %v403 = vld [vmem:[%s1 + $0x1e8] sm:$0xf]
        %v404 = vld [vmem:[%s1 + $0x1ec] sm:$0xf]
        %v405 = vld [vmem:[%s1 + $0x1f0] sm:$0xf]
        %v406 = vld [vmem:[%s1 + $0x1f4] sm:$0xf]
        %v407 = vld [vmem:[%s1 + $0x1f8] sm:$0xf]
        %v408 = vld [vmem:[%s1 + $0x1fc] sm:$0xf]
        %v537 = vunpack.c.l.b16 %v281
        %v538 = vunpack.c.l.b16 %v282
        %v539 = vunpack.c.l.b16 %v283
        %v540 = vunpack.c.l.b16 %v284
        %v541 = vunpack.c.l.b16 %v285
        %v542 = vunpack.c.l.b16 %v286
        %v543 = vunpack.c.l.b16 %v287
        %v544 = vunpack.c.l.b16 %v288
        %v545 = vunpack.c.l.b16 %v289
        %v546 = vunpack.c.l.b16 %v290
        %v547 = vunpack.c.l.b16 %v291
        %v548 = vunpack.c.l.b16 %v292
        %v549 = vunpack.c.l.b16 %v293
        %v550 = vunpack.c.l.b16 %v294
        %v551 = vunpack.c.l.b16 %v295
        %v552 = vunpack.c.l.b16 %v296
        %v553 = vunpack.c.l.b16 %v297
        %v554 = vunpack.c.l.b16 %v298
        %v555 = vunpack.c.l.b16 %v299
        %v556 = vunpack.c.l.b16 %v300
        %v557 = vunpack.c.l.b16 %v301
        %v558 = vunpack.c.l.b16 %v302
        %v559 = vunpack.c.l.b16 %v303
        %v560 = vunpack.c.l.b16 %v304
        %v561 = vunpack.c.l.b16 %v305
        %v562 = vunpack.c.l.b16 %v306
        %v563 = vunpack.c.l.b16 %v307
        %v564 = vunpack.c.l.b16 %v308
        %v565 = vunpack.c.l.b16 %v309
        %v566 = vunpack.c.l.b16 %v310
        %v567 = vunpack.c.l.b16 %v311
        %v568 = vunpack.c.l.b16 %v312
        %v569 = vunpack.c.l.b16 %v313
        %v570 = vunpack.c.l.b16 %v314
        %v571 = vunpack.c.l.b16 %v315
        %v572 = vunpack.c.l.b16 %v316
        %v573 = vunpack.c.l.b16 %v317
        %v574 = vunpack.c.l.b16 %v318
        %v575 = vunpack.c.l.b16 %v319
        %v576 = vunpack.c.l.b16 %v320
        %v577 = vunpack.c.l.b16 %v321
        %v578 = vunpack.c.l.b16 %v322
        %v579 = vunpack.c.l.b16 %v323
        %v580 = vunpack.c.l.b16 %v324
        %v581 = vunpack.c.l.b16 %v325
        %v582 = vunpack.c.l.b16 %v326
        %v583 = vunpack.c.l.b16 %v327
        %v584 = vunpack.c.l.b16 %v328
        %v585 = vunpack.c.l.b16 %v329
        %v586 = vunpack.c.l.b16 %v330
        %v587 = vunpack.c.l.b16 %v331
        %v588 = vunpack.c.l.b16 %v332
        %v589 = vunpack.c.l.b16 %v333
        %v590 = vunpack.c.l.b16 %v334
        %v591 = vunpack.c.l.b16 %v335
        %v592 = vunpack.c.l.b16 %v336
        %v593 = vunpack.c.l.b16 %v337
        %v594 = vunpack.c.l.b16 %v338
        %v595 = vunpack.c.l.b16 %v339
        %v596 = vunpack.c.l.b16 %v340
        %v597 = vunpack.c.l.b16 %v341
        %v598 = vunpack.c.l.b16 %v342
        %v599 = vunpack.c.l.b16 %v343
        %v600 = vunpack.c.l.b16 %v344
        %v601 = vunpack.c.l.b16 %v345
        %v602 = vunpack.c.l.b16 %v346
        %v603 = vunpack.c.l.b16 %v347
        %v604 = vunpack.c.l.b16 %v348
        %v605 = vunpack.c.l.b16 %v349
        %v606 = vunpack.c.l.b16 %v350
        %v607 = vunpack.c.l.b16 %v351
        %v608 = vunpack.c.l.b16 %v352
        %v609 = vunpack.c.l.b16 %v353
        %v610 = vunpack.c.l.b16 %v354
        %v611 = vunpack.c.l.b16 %v355
        %v612 = vunpack.c.l.b16 %v356
        %v613 = vunpack.c.l.b16 %v357
        %v614 = vunpack.c.l.b16 %v358
        %v615 = vunpack.c.l.b16 %v359
        %v616 = vunpack.c.l.b16 %v360
        %v617 = vunpack.c.l.b16 %v361
        %v618 = vunpack.c.l.b16 %v362
        %v619 = vunpack.c.l.b16 %v363
        %v620 = vunpack.c.l.b16 %v364
        %v621 = vunpack.c.l.b16 %v365
        %v622 = vunpack.c.l.b16 %v366
        %v623 = vunpack.c.l.b16 %v367
        %v624 = vunpack.c.l.b16 %v368
        %v625 = vunpack.c.l.b16 %v369
        %v626 = vunpack.c.l.b16 %v370
        %v627 = vunpack.c.l.b16 %v371
        %v628 = vunpack.c.l.b16 %v372
        %v629 = vunpack.c.l.b16 %v373
        %v630 = vunpack.c.l.b16 %v374
        %v631 = vunpack.c.l.b16 %v375
        %v632 = vunpack.c.l.b16 %v376
        %v633 = vunpack.c.l.b16 %v377
        %v634 = vunpack.c.l.b16 %v378
        %v635 = vunpack.c.l.b16 %v379
        %v636 = vunpack.c.l.b16 %v380
        %v637 = vunpack.c.l.b16 %v381
        %v638 = vunpack.c.l.b16 %v382
        %v639 = vunpack.c.l.b16 %v383
        %v640 = vunpack.c.l.b16 %v384
        %v641 = vunpack.c.l.b16 %v385
        %v642 = vunpack.c.l.b16 %v386
        %v643 = vunpack.c.l.b16 %v387
        %v644 = vunpack.c.l.b16 %v388
        %v645 = vunpack.c.l.b16 %v389
        %v646 = vunpack.c.l.b16 %v390
        %v647 = vunpack.c.l.b16 %v391
        %v648 = vunpack.c.l.b16 %v392
        %v649 = vunpack.c.l.b16 %v393
        %v650 = vunpack.c.l.b16 %v394
        %v651 = vunpack.c.l.b16 %v395
        %v652 = vunpack.c.l.b16 %v396
        %v653 = vunpack.c.l.b16 %v397
        %v654 = vunpack.c.l.b16 %v398
        %v655 = vunpack.c.l.b16 %v399
        %v656 = vunpack.c.l.b16 %v400
        %v657 = vunpack.c.l.b16 %v401
        %v658 = vunpack.c.l.b16 %v402
        %v659 = vunpack.c.l.b16 %v403
        %v660 = vunpack.c.l.b16 %v404
        %v661 = vunpack.c.l.b16 %v405
        %v662 = vunpack.c.l.b16 %v406
        %v663 = vunpack.c.l.b16 %v407
        %v664 = vunpack.c.l.b16 %v408
        %v665 = vpack.c.b16 %v538, %v537
        %v666 = vpack.c.b16 %v540, %v539
        %v667 = vpack.c.b16 %v542, %v541
        %v668 = vpack.c.b16 %v544, %v543
        %v669 = vpack.c.b16 %v546, %v545
        %v670 = vpack.c.b16 %v548, %v547
        %v671 = vpack.c.b16 %v550, %v549
        %v672 = vpack.c.b16 %v552, %v551
        %v673 = vpack.c.b16 %v554, %v553
        %v674 = vpack.c.b16 %v556, %v555
        %v675 = vpack.c.b16 %v558, %v557
        %v676 = vpack.c.b16 %v560, %v559
        %v677 = vpack.c.b16 %v562, %v561
        %v678 = vpack.c.b16 %v564, %v563
        %v679 = vpack.c.b16 %v566, %v565
        %v680 = vpack.c.b16 %v568, %v567
        %v681 = vpack.c.b16 %v570, %v569
        %v682 = vpack.c.b16 %v572, %v571
        %v683 = vpack.c.b16 %v574, %v573
        %v684 = vpack.c.b16 %v576, %v575
        %v685 = vpack.c.b16 %v578, %v577
        %v686 = vpack.c.b16 %v580, %v579
        %v687 = vpack.c.b16 %v582, %v581
        %v688 = vpack.c.b16 %v584, %v583
        %v689 = vpack.c.b16 %v586, %v585
        %v690 = vpack.c.b16 %v588, %v587
        %v691 = vpack.c.b16 %v590, %v589
        %v692 = vpack.c.b16 %v592, %v591
        %v693 = vpack.c.b16 %v594, %v593
        %v694 = vpack.c.b16 %v596, %v595
        %v695 = vpack.c.b16 %v598, %v597
        %v696 = vpack.c.b16 %v600, %v599
        %v697 = vpack.c.b16 %v602, %v601
        %v698 = vpack.c.b16 %v604, %v603
        %v699 = vpack.c.b16 %v606, %v605
        %v700 = vpack.c.b16 %v608, %v607
        %v701 = vpack.c.b16 %v610, %v609
        %v702 = vpack.c.b16 %v612, %v611
        %v703 = vpack.c.b16 %v614, %v613
        %v704 = vpack.c.b16 %v616, %v615
        %v705 = vpack.c.b16 %v618, %v617
        %v706 = vpack.c.b16 %v620, %v619
        %v707 = vpack.c.b16 %v622, %v621
        %v708 = vpack.c.b16 %v624, %v623
        %v709 = vpack.c.b16 %v626, %v625
        %v710 = vpack.c.b16 %v628, %v627
        %v711 = vpack.c.b16 %v630, %v629
        %v712 = vpack.c.b16 %v632, %v631
        %v713 = vpack.c.b16 %v634, %v633
        %v714 = vpack.c.b16 %v636, %v635
        %v715 = vpack.c.b16 %v638, %v637
        %v716 = vpack.c.b16 %v640, %v639
        %v717 = vpack.c.b16 %v642, %v641
        %v718 = vpack.c.b16 %v644, %v643
        %v719 = vpack.c.b16 %v646, %v645
        %v720 = vpack.c.b16 %v648, %v647
        %v721 = vpack.c.b16 %v650, %v649
        %v722 = vpack.c.b16 %v652, %v651
        %v723 = vpack.c.b16 %v654, %v653
        %v724 = vpack.c.b16 %v656, %v655
        %v725 = vpack.c.b16 %v658, %v657
        %v726 = vpack.c.b16 %v660, %v659
        %v727 = vpack.c.b16 %v662, %v661
        %v728 = vpack.c.b16 %v664, %v663
        %793 = vmatprep.subr.bf16.mxu0 0
        %794 = vmatpush1.bf16.msra.mxu0 %v672
        %795 = vmatprep.subr.bf16.mxu0 0
        %796 = vmatpush1.bf16.msra.mxu0 %v671
        %797 = vmatprep.subr.bf16.mxu0 0
        %798 = vmatpush1.bf16.msra.mxu0 %v670
        %799 = vmatprep.subr.bf16.mxu0 0
        %800 = vmatpush1.bf16.msra.mxu0 %v669
        %801 = vmatprep.subr.bf16.mxu0 0
        %802 = vmatpush1.bf16.msra.mxu0 %v668
        %803 = vmatprep.subr.bf16.mxu0 0
        %804 = vmatpush1.bf16.msra.mxu0 %v667
        %805 = vmatprep.subr.bf16.mxu0 0
        %806 = vmatpush1.bf16.msra.mxu0 %v666
        %807 = vmatprep.subr.bf16.mxu0 0
        %808 = vmatpush1.bf16.msra.mxu0 %v665
        %809 = vmatprep.subr.bf16.mxu0 0
        %810 = vmatpush2.bf16.msra.mxu0 %v680
        %811 = vmatprep.subr.bf16.mxu0 0
        %812 = vmatpush2.bf16.msra.mxu0 %v679
        %813 = vmatprep.subr.bf16.mxu0 0
        %814 = vmatpush2.bf16.msra.mxu0 %v678
        %815 = vmatprep.subr.bf16.mxu0 0
        %816 = vmatpush2.bf16.msra.mxu0 %v677
        %817 = vmatprep.subr.bf16.mxu0 0
        %818 = vmatpush2.bf16.msra.mxu0 %v676
        %819 = vmatprep.subr.bf16.mxu0 0
        %820 = vmatpush2.bf16.msra.mxu0 %v675
        %821 = vmatprep.subr.bf16.mxu0 0
        %822 = vmatpush2.bf16.msra.mxu0 %v674
        %823 = vmatprep.subr.bf16.mxu0 0
        %824 = vmatpush2.bf16.msra.mxu0 %v673
        %825 = vmatprep.mubr.bf16.mxu0 %v274
        %826 = vmatmul.mubr.bf16.gmra.mxu0 %v273
        %v827 = vpop.f32.mrf.mxu0
        %v828 = vadd.f32 0.0, %v827
        %v829 = vpop.f32.mrf.mxu0
        %v830 = vpop.f32.mrf.mxu0
        %v831 = vadd.f32 0.0, %v830
        %v832 = vpop.f32.mrf.mxu0
        %833 = vdwg.mxu0
        %834 = vmatprep.subr.bf16.mxu0 0
        %835 = vmatpush1.bf16.msra.mxu0 %v688
        %836 = vmatprep.subr.bf16.mxu0 0
        %837 = vmatpush1.bf16.msra.mxu0 %v687
        %838 = vmatprep.subr.bf16.mxu0 0
        %839 = vmatpush1.bf16.msra.mxu0 %v686
        %840 = vmatprep.subr.bf16.mxu0 0
        %841 = vmatpush1.bf16.msra.mxu0 %v685
        %842 = vmatprep.subr.bf16.mxu0 0
        %843 = vmatpush1.bf16.msra.mxu0 %v684
        %844 = vmatprep.subr.bf16.mxu0 0
        %845 = vmatpush1.bf16.msra.mxu0 %v683
        %846 = vmatprep.subr.bf16.mxu0 0
        %847 = vmatpush1.bf16.msra.mxu0 %v682
        %848 = vmatprep.subr.bf16.mxu0 0
        %849 = vmatpush1.bf16.msra.mxu0 %v681
        %850 = vmatprep.subr.bf16.mxu0 0
        %851 = vmatpush2.bf16.msra.mxu0 %v696
        %852 = vmatprep.subr.bf16.mxu0 0
        %853 = vmatpush2.bf16.msra.mxu0 %v695
        %854 = vmatprep.subr.bf16.mxu0 0
        %855 = vmatpush2.bf16.msra.mxu0 %v694
        %856 = vmatprep.subr.bf16.mxu0 0
        %857 = vmatpush2.bf16.msra.mxu0 %v693
        %858 = vmatprep.subr.bf16.mxu0 0
        %859 = vmatpush2.bf16.msra.mxu0 %v692
        %860 = vmatprep.subr.bf16.mxu0 0
        %861 = vmatpush2.bf16.msra.mxu0 %v691
        %862 = vmatprep.subr.bf16.mxu0 0
        %863 = vmatpush2.bf16.msra.mxu0 %v690
        %864 = vmatprep.subr.bf16.mxu0 0
        %865 = vmatpush2.bf16.msra.mxu0 %v689
        %866 = vmatprep.mubr.bf16.mxu0 %v276
        %867 = vmatmul.mubr.bf16.gmra.mxu0 %v275
        %v868 = vpop.f32.mrf.mxu0
        %v869 = vadd.f32 %v828, %v868
        %v870 = vpop.f32.mrf.mxu0
        %v871 = vpop.f32.mrf.mxu0
        %v872 = vadd.f32 %v831, %v871
        %v873 = vpop.f32.mrf.mxu0
        %874 = vdwg.mxu0
        %875 = vmatprep.subr.bf16.mxu0 0
        %876 = vmatpush1.bf16.msra.mxu0 %v704
        %877 = vmatprep.subr.bf16.mxu0 0
        %878 = vmatpush1.bf16.msra.mxu0 %v703
        %879 = vmatprep.subr.bf16.mxu0 0
        %880 = vmatpush1.bf16.msra.mxu0 %v702
        %881 = vmatprep.subr.bf16.mxu0 0
        %882 = vmatpush1.bf16.msra.mxu0 %v701
        %883 = vmatprep.subr.bf16.mxu0 0
        %884 = vmatpush1.bf16.msra.mxu0 %v700
        %885 = vmatprep.subr.bf16.mxu0 0
        %886 = vmatpush1.bf16.msra.mxu0 %v699
        %887 = vmatprep.subr.bf16.mxu0 0
        %888 = vmatpush1.bf16.msra.mxu0 %v698
        %889 = vmatprep.subr.bf16.mxu0 0
        %890 = vmatpush1.bf16.msra.mxu0 %v697
        %891 = vmatprep.subr.bf16.mxu0 0
        %892 = vmatpush2.bf16.msra.mxu0 %v712
        %893 = vmatprep.subr.bf16.mxu0 0
        %894 = vmatpush2.bf16.msra.mxu0 %v711
        %895 = vmatprep.subr.bf16.mxu0 0
        %896 = vmatpush2.bf16.msra.mxu0 %v710
        %897 = vmatprep.subr.bf16.mxu0 0
        %898 = vmatpush2.bf16.msra.mxu0 %v709
        %899 = vmatprep.subr.bf16.mxu0 0
        %900 = vmatpush2.bf16.msra.mxu0 %v708
        %901 = vmatprep.subr.bf16.mxu0 0
        %902 = vmatpush2.bf16.msra.mxu0 %v707
        %903 = vmatprep.subr.bf16.mxu0 0
        %904 = vmatpush2.bf16.msra.mxu0 %v706
        %905 = vmatprep.subr.bf16.mxu0 0
        %906 = vmatpush2.bf16.msra.mxu0 %v705
        %907 = vmatprep.mubr.bf16.mxu0 %v278
        %908 = vmatmul.mubr.bf16.gmra.mxu0 %v277
        %v909 = vpop.f32.mrf.mxu0
        %v910 = vadd.f32 %v869, %v909
        %v911 = vpop.f32.mrf.mxu0
        %v912 = vpop.f32.mrf.mxu0
        %v913 = vadd.f32 %v872, %v912
        %v914 = vpop.f32.mrf.mxu0
        %915 = vdwg.mxu0
        %916 = vmatprep.subr.bf16.mxu0 0
        %917 = vmatpush1.bf16.msra.mxu0 %v720
        %918 = vmatprep.subr.bf16.mxu0 0
        %919 = vmatpush1.bf16.msra.mxu0 %v719
        %920 = vmatprep.subr.bf16.mxu0 0
        %921 = vmatpush1.bf16.msra.mxu0 %v718
        %922 = vmatprep.subr.bf16.mxu0 0
        %923 = vmatpush1.bf16.msra.mxu0 %v717
        %924 = vmatprep.subr.bf16.mxu0 0
        %925 = vmatpush1.bf16.msra.mxu0 %v716
        %926 = vmatprep.subr.bf16.mxu0 0
        %927 = vmatpush1.bf16.msra.mxu0 %v715
        %928 = vmatprep.subr.bf16.mxu0 0
        %929 = vmatpush1.bf16.msra.mxu0 %v714
        %930 = vmatprep.subr.bf16.mxu0 0
        %931 = vmatpush1.bf16.msra.mxu0 %v713
        %932 = vmatprep.subr.bf16.mxu0 0
        %933 = vmatpush2.bf16.msra.mxu0 %v728
        %934 = vmatprep.subr.bf16.mxu0 0
        %935 = vmatpush2.bf16.msra.mxu0 %v727
        %936 = vmatprep.subr.bf16.mxu0 0
        %937 = vmatpush2.bf16.msra.mxu0 %v726
        %938 = vmatprep.subr.bf16.mxu0 0
        %939 = vmatpush2.bf16.msra.mxu0 %v725
        %940 = vmatprep.subr.bf16.mxu0 0
        %941 = vmatpush2.bf16.msra.mxu0 %v724
        %942 = vmatprep.subr.bf16.mxu0 0
        %943 = vmatpush2.bf16.msra.mxu0 %v723
        %944 = vmatprep.subr.bf16.mxu0 0
        %945 = vmatpush2.bf16.msra.mxu0 %v722
        %946 = vmatprep.subr.bf16.mxu0 0
        %947 = vmatpush2.bf16.msra.mxu0 %v721
        %948 = vmatprep.mubr.bf16.mxu0 %v280
        %949 = vmatmul.mubr.bf16.gmra.mxu0 %v279
        %v950 = vpop.f32.mrf.mxu0
        %v951 = vadd.f32 %v910, %v950
        %v952 = vpop.f32.mrf.mxu0
        %v953 = vpop.f32.mrf.mxu0
        %v954 = vadd.f32 %v913, %v953
        %v955 = vpop.f32.mrf.mxu0
        %956 = vdwg.mxu0
        %vm957 = vcmask 261120
        %v958 = vsel %vm957, %v951, 0.0
        %959 = vadd.xlane.f32.xlu0 %v958
        %v960 = vpop.xlane.xlu0 %959
        %v961 = vsel %vm957, %v954, 0.0
        %962 = vadd.xlane.f32.xlu0 %v961
        %v963 = vpop.xlane.xlu0 %962
        %v964 = vrcp.pop 32.0
        %v965 = vmul.f32 %v960, %v964
        %v966 = vmul.f32 %v963, %v964
        %v967 = vsub.f32 %v951, %v965
        %v968 = vsub.f32 %v954, %v966
        %v969 = vmul.f32 %v967, %v967
        %v970 = vmul.f32 %v968, %v968
        %v971 = vsel %vm957, %v969, 0.0
        %972 = vadd.xlane.f32.xlu0 %v971
        %v973 = vpop.xlane.xlu0 %972
        %v974 = vsel %vm957, %v970, 0.0
        %975 = vadd.xlane.f32.xlu0 %v974
        %v976 = vpop.xlane.xlu0 %975
        %v977 = vmul.f32 %v973, %v964
        %v978 = vmul.f32 %v976, %v964
        %v979 = vadd.f32 %v977, 1e-05
        %v980 = vadd.f32 %v978, 1e-05
        %v981 = vrsqrt.pop %v979
        %v982 = vrsqrt.pop %v980
        %v983 = vmul.f32 %v967, %v981
        %v984 = vmul.f32 %v968, %v982
        %v985 = vpack.c.bf16 %v984, %v983
        %v986 = vld [vmem:[%s2] sm:$0xf]
        %v987 = vld [vmem:[%s2 + $0x4] sm:$0xf]
        %v988 = vld [vmem:[%s2 + $0x8] sm:$0xf]
        %v989 = vld [vmem:[%s2 + $0xc] sm:$0xf]
        %v990 = vld [vmem:[%s3] sm:$0x1]
        %v992 = vlaneseq
        %v993 = vshrl.u32 %v992, 7
        %v994 = vsub.s32 0, %v993
        %v995 = vrot.slane %v990, %v994
        %v1001 = vunpack.c.l.b16 %v986
        %v1002 = vunpack.c.l.b16 %v987
        %v1003 = vunpack.c.l.b16 %v988
        %v1004 = vunpack.c.l.b16 %v989
        %v1005 = vpack.c.b16 %v1002, %v1001
        %v1006 = vpack.c.b16 %v1004, %v1003
        %v1010 = vsel %vm957, %v985, 0
        %1012 = vmatprep.subr.bf16.mxu0 0
        %1013 = vmatpush1.bf16.msra.mxu0 0
        %1014 = vmatprep.subr.bf16.mxu0 0
        %1015 = vmatpush1.bf16.msra.mxu0 0
        %1016 = vmatprep.subr.bf16.mxu0 0
        %1017 = vmatpush1.bf16.msra.mxu0 0
        %1018 = vmatprep.subr.bf16.mxu0 0
        %1019 = vmatpush1.bf16.msra.mxu0 0
        %1020 = vmatprep.subr.bf16.mxu0 0
        %1021 = vmatpush1.bf16.msra.mxu0 0
        %1022 = vmatprep.subr.bf16.mxu0 0
        %1023 = vmatpush1.bf16.msra.mxu0 0
        %1024 = vmatprep.subr.bf16.mxu0 0
        %1025 = vmatpush1.bf16.msra.mxu0 %v1006
        %1026 = vmatprep.subr.bf16.mxu0 0
        %1027 = vmatpush1.bf16.msra.mxu0 %v1005
        %1028 = vmatprep.subr.bf16.mxu0 0
        %1029 = vmatpush2.bf16.msra.mxu0 0
        %1030 = vmatprep.subr.bf16.mxu0 0
        %1031 = vmatpush2.bf16.msra.mxu0 0
        %1032 = vmatprep.subr.bf16.mxu0 0
        %1033 = vmatpush2.bf16.msra.mxu0 0
        %1034 = vmatprep.subr.bf16.mxu0 0
        %1035 = vmatpush2.bf16.msra.mxu0 0
        %1036 = vmatprep.subr.bf16.mxu0 0
        %1037 = vmatpush2.bf16.msra.mxu0 0
        %1038 = vmatprep.subr.bf16.mxu0 0
        %1039 = vmatpush2.bf16.msra.mxu0 0
        %1040 = vmatprep.subr.bf16.mxu0 0
        %1041 = vmatpush2.bf16.msra.mxu0 0
        %1042 = vmatprep.subr.bf16.mxu0 0
        %1043 = vmatpush2.bf16.msra.mxu0 0
        %1044 = vmatprep.mubr.bf16.mxu0 0
        %1045 = vmatmul.mubr.bf16.gmra.mxu0 %v1010
        %v1046 = vpop.f32.mrf.mxu0
        %v1047 = vadd.f32 %v995, %v1046
        %v1048 = vpop.f32.mrf.mxu0
        %v1049 = vpop.f32.mrf.mxu0
        %v1050 = vadd.f32 %v995, %v1049
        %v1051 = vpop.f32.mrf.mxu0
        %1052 = vdwg.mxu0
        %v1053 = vand.u32 2147483647, %v1047
        %vm1054 = vcmp.le.f32.partialorder %v1053, 0.7853982
        %vm1055 = vcmp.lt.s32.totalorder %v1047, 0
        %v1056 = vand.u32 %v1047, 2139095040
        %v1057 = vshrl.u32 %v1056, 23
        %v1058 = vsub.s32 %v1057, 127
        %v1059 = vand.u32 2147483647, %v1047
        %v1060 = vand.u32 %v1059, 8388607
        %v1061 = vor.u32 %v1060, 8388608
        %v1062 = vsub.s32 0, %v1061
        %v1063 = vadd.s32 %v1058, 1
        %vm1064 = vcmp.gt.s32.totalorder %v1063, 0
        %v1065 = vsel %vm1064, %v1063, 0
        %v1066 = vshrl.u32 %v1065, 5
        %v1067 = vand.u32 %v1065, 31
        %v1068 = vsub.s32 32, %v1067
        %v1069 = vshrl.u32 683565275, %v1068
        %v1070 = vshll.u32 683565275, %v1067
        %v1071 = vshrl.u32 2475754826, %v1068
        %v1072 = vor.u32 %v1070, %v1071
        %v1073 = vshll.u32 2475754826, %v1067
        %v1074 = vshrl.u32 2131351028, %v1068
        %v1075 = vor.u32 %v1073, %v1074
        %v1076 = vshll.u32 2131351028, %v1067
        %v1077 = vshrl.u32 2102212464, %v1068
        %v1078 = vor.u32 %v1076, %v1077
        %v1079 = vshll.u32 2102212464, %v1067
        %v1080 = vshrl.u32 920167782, %v1068
        %v1081 = vor.u32 %v1079, %v1080
        %v1082 = vshll.u32 920167782, %v1067
        %v1083 = vshrl.u32 1326507024, %v1068
        %v1084 = vor.u32 %v1082, %v1083
        %vm1085 = vcmp.lt.s32.totalorder %v1066, 1
        %vm1086 = vcmp.lt.s32.totalorder %v1066, 2
        %vm1087 = vcmp.lt.s32.totalorder %v1066, 3
        %vm1088 = vcmp.lt.s32.totalorder %v1066, 4
        %v1089 = vsel %vm1085, %v1069, %v1072
        %v1090 = vsel %vm1088, %v1078, 2102212464
        %v1091 = vsel %vm1087, %v1075, %v1090
        %v1092 = vsel %vm1086, %v1089, %v1091
        %v1093 = vsel %vm1085, %v1072, %v1075
        %v1094 = vsel %vm1088, %v1081, 920167782
        %v1095 = vsel %vm1087, %v1078, %v1094
        %v1096 = vsel %vm1086, %v1093, %v1095
        %v1097 = vsel %vm1085, %v1075, %v1078
        %v1098 = vsel %vm1088, %v1084, 1326507024
        %v1099 = vsel %vm1087, %v1081, %v1098
        %v1100 = vsel %vm1086, %v1097, %v1099
        %v1101 = vshll.u32 %v1061, 8
        %v1102 = vmul.u32.u64.compose %v1101, %v1100
        %v1103 = vextract.low.u32 %v1102
        %v1104 = vextract.high.u32 %v1102
        %v1105 = vmul.u32.u64.compose %v1101, %v1096
        %v1106 = vextract.low.u32 %v1105
        %v1107 = vextract.high.u32 %v1105
        %v1108 = vmul.u32 %v1101, %v1092
        %v1109 = vadd.s32 %v1104, %v1106
        %vm1110 = vc.u32 %v1104, %v1106
        %v1111 = vadd.s32 %v1107, 1
        %v1112 = vsel %vm1110, %v1111, %v1107
        %v1113 = vadd.s32 %v1108, %v1112
        %v1114 = vadd.s32 %v1113, 536870912
        %v1115 = vshrl.u32 %v1114, 30
        %v1116 = vshll.u32 %v1115, 30
        %v1117 = vsub.s32 %v1113, %v1116
        %vm1118 = vcmp.lt.s32.totalorder %v1117, 0
        %v1119 = vsub.s32 0, %v1117
        %v1120 = vsel %vm1118, %v1119, %v1117
        %v1121 = vclz %v1120
        %v1122 = vsub.s32 %v1121, 2
        %vm1123 = vcmp.gt.s32.totalorder 0, %v1122
        %v1124 = vsel %vm1123, 0, %v1122
        %v1125 = vsub.s32 32, %v1124
        %v1126 = vshll.u32 %v1117, %v1124
        %v1127 = vshrl.u32 %v1109, %v1125
        %v1128 = vor.u32 %v1126, %v1127
        %v1129 = vsub.s32 4294967266, %v1124
        %v1130 = vadd.s32 %v1129, 127
        %v1131 = vshll.u32 %v1130, 23
        %v1132 = vor.u32 4788187, %v1131
        %v1133 = vand.u32 2147483647, %v1132
        %v1135 = vcvt.s32.f32 %v1128
        %v1136 = vmul.f32 %v1135, %v1133
        %v1137 = vxor.u32 %v1136, 2147483648
        %v1138 = vsel %vm1055, %v1137, %v1136
        %v1139 = vsub.s32 4, %v1115
        %v1140 = vsel %vm1055, %v1139, %v1115
        %v1141 = vsel %vm1054, %v1047, %v1138
        %v1142 = vsel %vm1054, 0, %v1140
        %v1143 = vcosq.f32.pop %v1141
        %v1144 = vsinq.f32.pop %v1141
        %vm1145 = vweird.f32 %v1047
        %v1146 = vand.u32 %v1142, 3
        %vm1147 = vcmp.lt.s32.totalorder %v1146, 2
        %vm1148 = vcmp.eq.s32.totalorder %v1146, 0
        %v1149 = vxor.u32 %v1144, 2147483648
        %v1150 = vsel %vm1148, %v1143, %v1149
        %vm1151 = vcmp.eq.s32.totalorder %v1146, 2
        %v1152 = vxor.u32 %v1143, 2147483648
        %v1153 = vsel %vm1151, %v1152, %v1144
        %v1154 = vsel %vm1147, %v1150, %v1153
        %v1155 = vsel %vm1145, nan, %v1154
        %v1156 = vand.u32 2147483647, %v1050
        %vm1157 = vcmp.le.f32.partialorder %v1156, 0.7853982
        %vm1158 = vcmp.lt.s32.totalorder %v1050, 0
        %v1159 = vand.u32 %v1050, 2139095040
        %v1160 = vshrl.u32 %v1159, 23
        %v1161 = vsub.s32 %v1160, 127
        %v1162 = vand.u32 2147483647, %v1050
        %v1163 = vand.u32 %v1162, 8388607
        %v1164 = vor.u32 %v1163, 8388608
        %v1165 = vsub.s32 0, %v1164
        %v1166 = vadd.s32 %v1161, 1
        %vm1167 = vcmp.gt.s32.totalorder %v1166, 0
        %v1168 = vsel %vm1167, %v1166, 0
        %v1169 = vshrl.u32 %v1168, 5
        %v1170 = vand.u32 %v1168, 31
        %v1171 = vsub.s32 32, %v1170
        %v1172 = vshrl.u32 683565275, %v1171
        %v1173 = vshll.u32 683565275, %v1170
        %v1174 = vshrl.u32 2475754826, %v1171
        %v1175 = vor.u32 %v1173, %v1174
        %v1176 = vshll.u32 2475754826, %v1170
        %v1177 = vshrl.u32 2131351028, %v1171
        %v1178 = vor.u32 %v1176, %v1177
        %v1179 = vshll.u32 2131351028, %v1170
        %v1180 = vshrl.u32 2102212464, %v1171
        %v1181 = vor.u32 %v1179, %v1180
        %v1182 = vshll.u32 2102212464, %v1170
        %v1183 = vshrl.u32 920167782, %v1171
        %v1184 = vor.u32 %v1182, %v1183
        %v1185 = vshll.u32 920167782, %v1170
        %v1186 = vshrl.u32 1326507024, %v1171
        %v1187 = vor.u32 %v1185, %v1186
        %vm1188 = vcmp.lt.s32.totalorder %v1169, 1
        %vm1189 = vcmp.lt.s32.totalorder %v1169, 2
        %vm1190 = vcmp.lt.s32.totalorder %v1169, 3
        %vm1191 = vcmp.lt.s32.totalorder %v1169, 4
        %v1192 = vsel %vm1188, %v1172, %v1175
        %v1193 = vsel %vm1191, %v1181, 2102212464
        %v1194 = vsel %vm1190, %v1178, %v1193
        %v1195 = vsel %vm1189, %v1192, %v1194
        %v1196 = vsel %vm1188, %v1175, %v1178
        %v1197 = vsel %vm1191, %v1184, 920167782
        %v1198 = vsel %vm1190, %v1181, %v1197
        %v1199 = vsel %vm1189, %v1196, %v1198
        %v1200 = vsel %vm1188, %v1178, %v1181
        %v1201 = vsel %vm1191, %v1187, 1326507024
        %v1202 = vsel %vm1190, %v1184, %v1201
        %v1203 = vsel %vm1189, %v1200, %v1202
        %v1204 = vshll.u32 %v1164, 8
        %v1205 = vmul.u32.u64.compose %v1204, %v1203
        %v1206 = vextract.low.u32 %v1205
        %v1207 = vextract.high.u32 %v1205
        %v1208 = vmul.u32.u64.compose %v1204, %v1199
        %v1209 = vextract.low.u32 %v1208
        %v1210 = vextract.high.u32 %v1208
        %v1211 = vmul.u32 %v1204, %v1195
        %v1212 = vadd.s32 %v1207, %v1209
        %vm1213 = vc.u32 %v1207, %v1209
        %v1214 = vadd.s32 %v1210, 1
        %v1215 = vsel %vm1213, %v1214, %v1210
        %v1216 = vadd.s32 %v1211, %v1215
        %v1217 = vadd.s32 %v1216, 536870912
        %v1218 = vshrl.u32 %v1217, 30
        %v1219 = vshll.u32 %v1218, 30
        %v1220 = vsub.s32 %v1216, %v1219
        %vm1221 = vcmp.lt.s32.totalorder %v1220, 0
        %v1222 = vsub.s32 0, %v1220
        %v1223 = vsel %vm1221, %v1222, %v1220
        %v1224 = vclz %v1223
        %v1225 = vsub.s32 %v1224, 2
        %vm1226 = vcmp.gt.s32.totalorder 0, %v1225
        %v1227 = vsel %vm1226, 0, %v1225
        %v1228 = vsub.s32 32, %v1227
        %v1229 = vshll.u32 %v1220, %v1227
        %v1230 = vshrl.u32 %v1212, %v1228
        %v1231 = vor.u32 %v1229, %v1230
        %v1232 = vsub.s32 4294967266, %v1227
        %v1233 = vadd.s32 %v1232, 127
        %v1234 = vshll.u32 %v1233, 23
        %v1235 = vor.u32 4788187, %v1234
        %v1236 = vand.u32 2147483647, %v1235
        %v1238 = vcvt.s32.f32 %v1231
        %v1239 = vmul.f32 %v1238, %v1236
        %v1240 = vxor.u32 %v1239, 2147483648
        %v1241 = vsel %vm1158, %v1240, %v1239
        %v1242 = vsub.s32 4, %v1218
        %v1243 = vsel %vm1158, %v1242, %v1218
        %v1244 = vsel %vm1157, %v1050, %v1241
        %v1245 = vsel %vm1157, 0, %v1243
        %v1246 = vcosq.f32.pop %v1244
        %v1247 = vsinq.f32.pop %v1244
        %vm1248 = vweird.f32 %v1050
        %v1249 = vand.u32 %v1245, 3
        %vm1250 = vcmp.lt.s32.totalorder %v1249, 2
        %vm1251 = vcmp.eq.s32.totalorder %v1249, 0
        %v1252 = vxor.u32 %v1247, 2147483648
        %v1253 = vsel %vm1251, %v1246, %v1252
        %vm1254 = vcmp.eq.s32.totalorder %v1249, 2
        %v1255 = vxor.u32 %v1246, 2147483648
        %v1256 = vsel %vm1254, %v1255, %v1247
        %v1257 = vsel %vm1250, %v1253, %v1256
        %v1258 = vsel %vm1248, nan, %v1257
        %v1259 = vpack.c.bf16 %v1258, %v1155
        %v1260 = vld [vmem:[%s4] sm:$0xff]
        %v1261 = vld [vmem:[%s4 + $0x8] sm:$0xff]
        %v1262 = vld [vmem:[%s4 + $0x10] sm:$0xff]
        %v1263 = vld [vmem:[%s4 + $0x18] sm:$0xff]
        %v1264 = vld [vmem:[%s4 + $0x20] sm:$0xff]
        %v1265 = vld [vmem:[%s4 + $0x28] sm:$0xff]
        %v1266 = vld [vmem:[%s4 + $0x30] sm:$0xff]
        %v1267 = vld [vmem:[%s4 + $0x38] sm:$0xff]
        %v1268 = vld [vmem:[%s4 + $0x40] sm:$0xff]
        %v1269 = vld [vmem:[%s4 + $0x48] sm:$0xff]
        %v1270 = vld [vmem:[%s4 + $0x50] sm:$0xff]
        %v1271 = vld [vmem:[%s4 + $0x58] sm:$0xff]
        %v1272 = vld [vmem:[%s4 + $0x60] sm:$0xff]
        %v1273 = vld [vmem:[%s4 + $0x68] sm:$0xff]
        %v1274 = vld [vmem:[%s4 + $0x70] sm:$0xff]
        %v1275 = vld [vmem:[%s4 + $0x78] sm:$0xff]
        %v1292 = vunpack.c.l.b16 %v1260
        %v1293 = vunpack.c.h.b16 %v1260
        %v1294 = vunpack.c.l.b16 %v1261
        %v1295 = vunpack.c.h.b16 %v1261
        %v1296 = vunpack.c.l.b16 %v1262
        %v1297 = vunpack.c.h.b16 %v1262
        %v1298 = vunpack.c.l.b16 %v1263
        %v1299 = vunpack.c.h.b16 %v1263
        %v1300 = vunpack.c.l.b16 %v1264
        %v1301 = vunpack.c.h.b16 %v1264
        %v1302 = vunpack.c.l.b16 %v1265
        %v1303 = vunpack.c.h.b16 %v1265
        %v1304 = vunpack.c.l.b16 %v1266
        %v1305 = vunpack.c.h.b16 %v1266
        %v1306 = vunpack.c.l.b16 %v1267
        %v1307 = vunpack.c.h.b16 %v1267
        %v1308 = vunpack.c.l.b16 %v1268
        %v1309 = vunpack.c.h.b16 %v1268
        %v1310 = vunpack.c.l.b16 %v1269
        %v1311 = vunpack.c.h.b16 %v1269
        %v1312 = vunpack.c.l.b16 %v1270
        %v1313 = vunpack.c.h.b16 %v1270
        %v1314 = vunpack.c.l.b16 %v1271
        %v1315 = vunpack.c.h.b16 %v1271
        %v1316 = vunpack.c.l.b16 %v1272
        %v1317 = vunpack.c.h.b16 %v1272
        %v1318 = vunpack.c.l.b16 %v1273
        %v1319 = vunpack.c.h.b16 %v1273
        %v1320 = vunpack.c.l.b16 %v1274
        %v1321 = vunpack.c.h.b16 %v1274
        %v1322 = vunpack.c.l.b16 %v1275
        %v1323 = vunpack.c.h.b16 %v1275
        %v1324 = vpack.c.b16 %v1294, %v1292
        %v1325 = vpack.c.b16 %v1295, %v1293
        %v1326 = vpack.c.b16 %v1298, %v1296
        %v1327 = vpack.c.b16 %v1299, %v1297
        %v1328 = vpack.c.b16 %v1302, %v1300
        %v1329 = vpack.c.b16 %v1303, %v1301
        %v1330 = vpack.c.b16 %v1306, %v1304
        %v1331 = vpack.c.b16 %v1307, %v1305
        %v1332 = vpack.c.b16 %v1310, %v1308
        %v1333 = vpack.c.b16 %v1311, %v1309
        %v1334 = vpack.c.b16 %v1314, %v1312
        %v1335 = vpack.c.b16 %v1315, %v1313
        %v1336 = vpack.c.b16 %v1318, %v1316
        %v1337 = vpack.c.b16 %v1319, %v1317
        %v1338 = vpack.c.b16 %v1322, %v1320
        %v1339 = vpack.c.b16 %v1323, %v1321
        %1356 = vmatprep.subr.bf16.mxu0 %v1339
        %1357 = vmatpush1.bf16.msra.mxu0 %v1338
        %1358 = vmatprep.subr.bf16.mxu0 %v1337
        %1359 = vmatpush1.bf16.msra.mxu0 %v1336
        %1360 = vmatprep.subr.bf16.mxu0 %v1335
        %1361 = vmatpush1.bf16.msra.mxu0 %v1334
        %1362 = vmatprep.subr.bf16.mxu0 %v1333
        %1363 = vmatpush1.bf16.msra.mxu0 %v1332
        %1364 = vmatprep.subr.bf16.mxu0 %v1331
        %1365 = vmatpush1.bf16.msra.mxu0 %v1330
        %1366 = vmatprep.subr.bf16.mxu0 %v1329
        %1367 = vmatpush1.bf16.msra.mxu0 %v1328
        %1368 = vmatprep.subr.bf16.mxu0 %v1327
        %1369 = vmatpush1.bf16.msra.mxu0 %v1326
        %1370 = vmatprep.subr.bf16.mxu0 %v1325
        %1371 = vmatpush1.bf16.msra.mxu0 %v1324
        %1372 = vmatprep.subr.bf16.mxu0 0
        %1373 = vmatpush2.bf16.msra.mxu0 0
        %1374 = vmatprep.subr.bf16.mxu0 0
        %1375 = vmatpush2.bf16.msra.mxu0 0
        %1376 = vmatprep.subr.bf16.mxu0 0
        %1377 = vmatpush2.bf16.msra.mxu0 0
        %1378 = vmatprep.subr.bf16.mxu0 0
        %1379 = vmatpush2.bf16.msra.mxu0 0
        %1380 = vmatprep.subr.bf16.mxu0 0
        %1381 = vmatpush2.bf16.msra.mxu0 0
        %1382 = vmatprep.subr.bf16.mxu0 0
        %1383 = vmatpush2.bf16.msra.mxu0 0
        %1384 = vmatprep.subr.bf16.mxu0 0
        %1385 = vmatpush2.bf16.msra.mxu0 0
        %1386 = vmatprep.subr.bf16.mxu0 0
        %1387 = vmatpush2.bf16.msra.mxu0 0
        %1388 = vmatprep.mubr.bf16.mxu0 0
        %1389 = vmatmul.mubr.bf16.gmra.mxu0 %v1259
        %v1390 = vpop.f32.mrf.mxu0
        %v1391 = vadd.f32 0.0, %v1390
        %v1392 = vpop.f32.mrf.mxu0
        %v1393 = vadd.f32 0.0, %v1392
        %v1394 = vpop.f32.mrf.mxu0
        %v1395 = vadd.f32 0.0, %v1394
        %v1396 = vpop.f32.mrf.mxu0
        %v1397 = vadd.f32 0.0, %v1396
        %1398 = vdwg.mxu0
        %v1399 = vld [vmem:[%s5] sm:$0x1]
        %v1401 = vlaneseq
        %v1402 = vshrl.u32 %v1401, 7
        %v1403 = vsub.s32 0, %v1402
        %v1404 = vrot.slane %v1399, %v1403
        %v1406 = vadd.f32 %v1391, %v1404
        %v1407 = vadd.f32 %v1395, %v1404
        %v1408 = vunpack.c.l.bf16 %v1259
        %v1409 = vunpack.c.h.bf16 %v1259
        %v1410 = vmul.f32 %v1393, %v1408
        %v1411 = vmul.f32 %v1397, %v1409
        %1412 = vadd.xlane.f32.xlu0 %v1410
        %v1413 = vpop.xlane.xlu0 %1412
        %1414 = vadd.xlane.f32.xlu0 %v1411
        %v1415 = vpop.xlane.xlu0 %1414
        %v1416 = vmul.f32 %v1413, 0.3926991
        %v1417 = vmul.f32 %v1415, 0.3926991
        %v1418 = vadd.f32 %v1416, 1.0
        %v1419 = vadd.f32 %v1417, 1.0
        %v1420 = vrsqrt.pop %v1418
        %v1421 = vrsqrt.pop %v1419
        %v1422 = vmul.f32 %v1406, %v1420
        %v1423 = vmul.f32 %v1407, %v1421
        %v1424 = vpack.c.bf16 %v1423, %v1422
        %v1426 = vunpack.c.l.b16 %v1424
        %v1427 = vunpack.c.h.b16 %v1424
        %v1428 = vpack.c.b16 %v1426, %v1426
        %v1429 = vpack.c.b16 %v1427, %v1427
        %1432 = vst [vmem:[%s247] sm:$0xf] %v1428
        %1433 = vst [vmem:[%s247 + $0x4] sm:$0xf] %v1429
        %s1434 = sand.u32 %s159, 1
        %s1435 = scalar_lea.sflag [#allocation3], %s1434
        %s1436 = sand.u32 %s159, 1
        %s1437 = smul.addr %s1436, 8
        %s1438 = scalar_lea.vmem [#allocation2], %s1437
        // Predicated region
        $region45: #{tpu_custom_call.1} parent=43 // pred_check
          %p1439 = pneg %p169
        $region46: #{tpu_custom_call.1} parent=43 // pred_check_branch
          %1441 = sbr.rel (%p1439) target = $region48
        $region47: #{tpu_custom_call.1} parent=43 // pred_region
          %s1442 = smul.u32 2, %s20
          %s1444 = ssub.s32 128, 128
          %1445 = vsyncadd %s1435, %s1444
          %s1446 = smul.addr %s1442, 64
          %s1447 = scalar_lea.hbm %s6, %s1446
          %s1448 = sshll.u32 %s1438, 4
          %s1449 = int_to_ptr.vmem [resolvable:$true] %s1448
          %1454 = dma.vmem_to_hbm [thread:$0]  %s1449, 128, %s1447, %s1435, 64, 64, 4
        $region48: #{tpu_custom_call.1} parent=43 // pred_fallthru
          _
      $region44: #{tpu_custom_call.1} parent=5 // pred_fallthru
        _
      %p1455 = scmp.le.s32.totalorder 2, %s15
      // Predicated region
      $region49: #{tpu_custom_call.1} parent=5 // pred_check
        %p1456 = pneg %p1455
      $region50: #{tpu_custom_call.1} parent=5 // pred_check_branch
        %1458 = sbr.rel (%p1456) target = $region52
      $region51: #{tpu_custom_call.1} parent=5 // pred_region
        %s1459 = ssub.s32 %s15, 2
        // Predicated region
        $region53: #{tpu_custom_call.1} parent=51 // pred_check
          %p1460 = pneg %p175
        $region54: #{tpu_custom_call.1} parent=51 // pred_check_branch
          %1462 = sbr.rel (%p1460) target = $region56
        $region55: #{tpu_custom_call.1} parent=51 // pred_region
          %s1463 = sand.u32 %s160, 1
          %s1464 = scalar_lea.sflag [#allocation3], %s1463
          %s1465 = sand.u32 %s160, 1
          %s1466 = smul.addr %s1465, 8
          %s1467 = scalar_lea.vmem [#allocation2], %s1466
          %1468 = dma.done %s1464, 128
        $region56: #{tpu_custom_call.1} parent=51 // pred_fallthru
          _
      $region52: #{tpu_custom_call.1} parent=5 // pred_fallthru
        _
    $region6: #{tpu_custom_call.1} parent=1 // loop_footer
      %s19 = sadd.s32 1, %s15
    $region7: #{tpu_custom_call.1} parent=1 // loop_footer_branch
      %14 = sbr.rel target = $region3
    $region8: #{tpu_custom_call.1} parent=1 // loop_exit
      _
    %1469 = vsyncpa [#allocation3], 1
    %s1470 = scalar_lea.sflag [#allocation3], 1
    %1471 = vsyncpa %s1470, 1

</llo_original>
